<compile_context>
chip_gen: v6e
topology: v6e:2x2x1
jax: 0.10.0
libtpu: 0.0.40
codegen_flags: <defaults>
</compile_context>

<pallas_src>
import jax
import jax.numpy as jnp
from jax import lax
from jax.experimental import pallas as pl
from jax.experimental.pallas import tpu as pltpu


_PALLAS_MIN_BYTES = 2 << 20  # below this, fused einsum beats kernel launch cost


def _round_up(x, m):
    return ((x + m - 1) // m) * m


def _pick_b_tile(B, K, L):
    """Batches packed per grid step so the packed lane width reaches ~128."""
    width = max(K, L)
    b_tile = 1 if width >= 128 else -(-128 // width)  # ceil(128 / width)
    # v7x megacore: keep at least 2 batch blocks so the "parallel" grid axis
    # can be sharded across both TensorCores (no effect on v5e/v6e: 1 TC).
    if B >= 2:
        b_tile = min(b_tile, B // 2)
    return max(1, min(b_tile, B))


def _pick_tile_n(N):
    """Contraction tile and padded N (zero-padding does not change Q^T V)."""
    if N <= 1024:
        n_pad = _round_up(N, 8)
        return n_pad, n_pad
    # Bounded reduction tile keeps the double-buffered footprint small on every
    # generation (v7x has only 64 MiB VMEM) and the pipeline deep.
    return 512, _round_up(N, 512)


def _vmem_limit_bytes(tile_n, KW, LW, itemsize):
    """Padding-aware double-buffered footprint (lanes round to 128, sublanes
    to 8) plus slack, for CompilerParams.vmem_limit_bytes."""
    lhs = 2 * _round_up(KW, 8) * _round_up(tile_n, 128) * itemsize
    rhs = 2 * _round_up(tile_n, 8) * _round_up(LW, 128) * itemsize
    out = 2 * _round_up(KW, 8) * _round_up(LW, 128) * 4
    need = lhs + rhs + out
    return int(min(64 << 20, max(2 * need, 16 << 20)))


# ----------------------------------------------------------------------------
# Kernel: o[g] += Qp[g, :, n-tile] @ Vp[g, n-tile, :] accumulated over N.
# ----------------------------------------------------------------------------
def _packed_gram_kernel(q_ref, v_ref, o_ref):
    @pl.when(pl.program_id(1) == 0)
    def _init():
        o_ref[...] = jnp.zeros_like(o_ref)

    # Single wide MXU matmul per step: (KW, tile_n) @ (tile_n, LW) -> (KW, LW),
    # canonical operand order (no in-kernel transpose), f32 accumulation into
    # the lane-dense output block that stays VMEM-resident across the N axis.
    o_ref[0] += jnp.dot(q_ref[0], v_ref[0], preferred_element_type=jnp.float32)


def bmm_qt_v(Q, V, *, force_pallas=False, cast_to_bf16=False):
    """M[b] = Q[b]^T @ V[b] for Q:(B,N,K), V:(B,N,L) -> (B,K,L) float32."""
    B, N, K = Q.shape
    Bv, Nv, L = V.shape
    assert (B, N) == (Bv, Nv), (Q.shape, V.shape)

    itemsize = jnp.dtype(Q.dtype).itemsize
    if not force_pallas and B * N * (K + L) * itemsize < _PALLAS_MIN_BYTES:
        # Tiny problem: Pallas launch + ~0.35us/grid-step exceeds the work and
        # prevents XLA from fusing the Gram into the SVD prologue.
        return jnp.einsum("bnk,bnl->bkl", Q, V,
                          precision=lax.Precision.HIGHEST).astype(jnp.float32)

    if cast_to_bf16:
        # HBM-bandwidth-bound kernel: halving input bytes ~halves wall clock on
        # v6e/v7x.  Off by default: arccos near |s|=1 amplifies input error.
        Q = Q.astype(jnp.bfloat16)
        V = V.astype(jnp.bfloat16)
        itemsize = 2

    b_tile = _pick_b_tile(B, K, L)
    G = -(-B // b_tile)
    B_pad = G * b_tile
    tile_n, N_pad = _pick_tile_n(N)

    if B_pad != B or N_pad != N:
        Q = jnp.pad(Q, ((0, B_pad - B), (0, N_pad - N), (0, 0)))
        V = jnp.pad(V, ((0, B_pad - B), (0, N_pad - N), (0, 0)))

    KW, LW = b_tile * K, b_tile * L
    # Layout plumbing (one XLA copy each): pack b_tile batches along lanes and
    # pre-transpose the LHS so the kernel issues a canonical MXU matmul.
    Qp = Q.reshape(G, b_tile, N_pad, K).transpose(0, 1, 3, 2).reshape(G, KW, N_pad)
    Vp = V.reshape(G, b_tile, N_pad, L).transpose(0, 2, 1, 3).reshape(G, N_pad, LW)

    grid = (G, N_pad // tile_n)
    cost = pl.CostEstimate(
        flops=2 * G * KW * LW * N_pad,
        transcendentals=0,
        bytes_accessed=(Qp.size + Vp.size) * itemsize + G * KW * LW * 4,
    )
    packed = pl.pallas_call(
        _packed_gram_kernel,
        out_shape=jax.ShapeDtypeStruct((G, KW, LW), jnp.float32),
        grid=grid,
        in_specs=[
            pl.BlockSpec((1, KW, tile_n), lambda g, n: (g, 0, n)),
            pl.BlockSpec((1, tile_n, LW), lambda g, n: (g, n, 0)),
        ],
        out_specs=pl.BlockSpec((1, KW, LW), lambda g, n: (g, 0, 0)),
        compiler_params=pltpu.CompilerParams(
            dimension_semantics=("parallel", "arbitrary"),
            vmem_limit_bytes=_vmem_limit_bytes(tile_n, KW, LW, itemsize),
        ),
        cost_estimate=cost,
    )(Qp, Vp)

    # Keep only the per-batch (K, L) block-diagonal of the packed cross-Gram.
    Gm = packed.reshape(G, b_tile, K, b_tile, L)
    idx = jnp.arange(b_tile)
    M = Gm[:, idx, :, idx, :]                    # (b_tile, G, K, L)
    M = jnp.transpose(M, (1, 0, 2, 3)).reshape(B_pad, K, L)
    return M[:B]


# ----------------------------------------------------------------------------
# Module-equivalent wrapper
# ----------------------------------------------------------------------------
def principal_angle(Q, V, angle_type="biggest", reduction="mean",
                    clip_value=True, *, force_pallas=False, cast_to_bf16=False):
    """Pallas-backed equivalent of PrincipalAngle.forward(Q, V)."""
    M = bmm_qt_v(Q, V, force_pallas=force_pallas, cast_to_bf16=cast_to_bf16)

    # TODO(synk): SVD has no Pallas equivalent; done with jnp.linalg.svd on the
    # tiny (B, K, L) matrices.
    s = jnp.linalg.svd(M, compute_uv=False)

    # Tiny elementwise / reduction tail: plain JAX so XLA fuses it with the SVD
    # epilogue (a dedicated pallas_call here would be pure launch cost).
    if clip_value:
        s = jnp.clip(s, -1.0, 1.0)
    angles = jnp.arccos(s)
    angle = (jnp.max(angles, axis=-1) if angle_type == "biggest"
             else jnp.min(angles, axis=-1))
    if reduction == "mean":
        return jnp.mean(angle)
    elif reduction == "sum":
        return jnp.sum(angle)
    return angle


# ----------------------------------------------------------------------------
# Pure-JAX reference (mirrors the PyTorch forward literally)
# ----------------------------------------------------------------------------
def principal_angle_ref(Q, V, angle_type="biggest", reduction="mean",
                        clip_value=True):
    M = jnp.einsum("bnk,bnl->bkl", Q, V, precision=lax.Precision.HIGHEST)
    s = jnp.linalg.svd(M, compute_uv=False)
    if clip_value:
        s = jnp.clip(s, -1.0, 1.0)
    angles = jnp.arccos(s)
    angle = (jnp.max(angles, axis=-1) if angle_type == "biggest"
             else jnp.min(angles, axis=-1))
    if reduction == "mean":
        return jnp.mean(angle)
    elif reduction == "sum":
        return jnp.sum(angle)
    return angle


if __name__ == "__main__":
    key = jax.random.PRNGKey(0)

    # --- Main demo: shapes where the Pallas path is exercised (B=32, N=512,
    # K=8 -> b_tile=16, packed MXU width 128, grid (2, 1)). ---
    B, N, K = 32, 512, 8
    kq, kv = jax.random.split(key)
    Q = jnp.linalg.qr(jax.random.normal(kq, (B, N, K), dtype=jnp.float32))[0]
    V = jnp.linalg.qr(jax.random.normal(kv, (B, N, K), dtype=jnp.float32))[0]

    # 1) Pallas cross-Gram vs plain einsum.
    M_pl = jax.block_until_ready(bmm_qt_v(Q, V, force_pallas=True))
    M_ref = jnp.einsum("bnk,bnl->bkl", Q, V, precision=lax.Precision.HIGHEST)
    assert jnp.allclose(M_pl, M_ref, atol=1e-4, rtol=1e-4), "Gram mismatch"

    # 2) Full module forward vs pure-JAX reference.
    out = jax.block_until_ready(
        principal_angle(Q, V, angle_type="biggest", reduction="mean",
                        clip_value=True, force_pallas=True))
    ref = principal_angle_ref(Q, V, angle_type="biggest", reduction="mean",
                              clip_value=True)
    assert jnp.allclose(out, ref, atol=1e-4, rtol=1e-4), (out, ref)

    # 3) Padding path: B and N not multiples of the tiles.
    kq2, kv2 = jax.random.split(jax.random.PRNGKey(1))
    Q2 = jax.random.normal(kq2, (5, 300, 8), dtype=jnp.float32)
    V2 = jax.random.normal(kv2, (5, 300, 8), dtype=jnp.float32)
    M2 = jax.block_until_ready(bmm_qt_v(Q2, V2, force_pallas=True))
    M2_ref = jnp.einsum("bnk,bnl->bkl", Q2, V2, precision=lax.Precision.HIGHEST)
    assert jnp.allclose(M2, M2_ref, atol=1e-3, rtol=1e-3), "padded Gram mismatch"

    # 4) Tiny problem (torch-like demo size): auto fallback, same semantics.
    kq3, kv3 = jax.random.split(jax.random.PRNGKey(2))
    Q3 = jnp.linalg.qr(jax.random.normal(kq3, (2, 16, 8), dtype=jnp.float32))[0]
    V3 = jnp.linalg.qr(jax.random.normal(kv3, (2, 16, 8), dtype=jnp.float32))[0]
    out3 = jax.block_until_ready(principal_angle(Q3, V3))
    ref3 = principal_angle_ref(Q3, V3)
    assert jnp.allclose(out3, ref3, atol=1e-5, rtol=1e-5), (out3, ref3)

    print("KERNEL_OK")
</pallas_src>

<mosaic_0001>
module attributes {stable_mosaic.version = 11 : i64} {
  func.func @_packed_gram_kernel(%arg0: i32, %arg1: i32, %arg2: memref<1x128x512xf32, #tpu.memory_space<vmem>>, %arg3: memref<1x512x128xf32, #tpu.memory_space<vmem>>, %arg4: memref<1x128x128xf32, #tpu.memory_space<vmem>>) attributes {dimension_semantics = [#tpu.dimension_semantics<parallel>, #tpu.dimension_semantics<arbitrary>], iteration_bounds = array<i64: 2, 1>, scalar_prefetch = 0 : i64, scratch_operands = 0 : i64, tpu.core_type = #tpu.core_type<tc>, window_params = [{transform_indices = @transform_0, window_bounds = array<i64: 1, 128, 512>}, {transform_indices = @transform_1, window_bounds = array<i64: 1, 512, 128>}, {transform_indices = @transform_2, window_bounds = array<i64: 1, 128, 128>}]} {
    %c0_i32 = arith.constant 0 : i32
    %0 = arith.cmpi eq, %arg1, %c0_i32 : i32
    %1 = arith.extui %0 : i1 to i32
    %c0_i32_0 = arith.constant 0 : i32
    %2 = arith.cmpi ne, %1, %c0_i32_0 : i32
    scf.if %2 {
      %cst_12 = arith.constant 0.000000e+00 : f32
      %14 = vector.broadcast %cst_12 : f32 to vector<1x128x128xf32>
      %c0_13 = arith.constant 0 : index
      %c0_14 = arith.constant 0 : index
      %c0_15 = arith.constant 0 : index
      %15 = vector.load %arg4[%c0_13, %c0_14, %c0_15] : memref<1x128x128xf32, #tpu.memory_space<vmem>>, vector<1x128x128xf32>
      tpu.vector_store %arg4[%c0_13, %c0_14, %c0_15], %14 {strides = array<i32>} : memref<1x128x128xf32, #tpu.memory_space<vmem>>, vector<1x128x128xf32>,
    } else {
    }
    %c0 = arith.constant 0 : index
    %c0_1 = arith.constant 0 : index
    %c0_2 = arith.constant 0 : index
    %3 = vector.load %arg4[%c0, %c0_1, %c0_2] : memref<1x128x128xf32, #tpu.memory_space<vmem>>, vector<1x128x128xf32>
    %4 = vector.shape_cast %3 : vector<1x128x128xf32> to vector<128x128xf32>
    %c0_3 = arith.constant 0 : index
    %c0_4 = arith.constant 0 : index
    %c0_5 = arith.constant 0 : index
    %5 = vector.load %arg2[%c0_3, %c0_4, %c0_5] : memref<1x128x512xf32, #tpu.memory_space<vmem>>, vector<1x128x512xf32>
    %6 = vector.shape_cast %5 : vector<1x128x512xf32> to vector<128x512xf32>
    %c0_6 = arith.constant 0 : index
    %c0_7 = arith.constant 0 : index
    %c0_8 = arith.constant 0 : index
    %7 = vector.load %arg3[%c0_6, %c0_7, %c0_8] : memref<1x512x128xf32, #tpu.memory_space<vmem>>, vector<1x512x128xf32>
    %8 = vector.shape_cast %7 : vector<1x512x128xf32> to vector<512x128xf32>
    %cst = arith.constant dense<0.000000e+00> : vector<128x128xf32>
    %9 = tpu.matmul %6, %8, %cst {dimension_numbers = #tpu.dot_dimension_numbers<[1], [0], [0], [1], [0, 0, 1, 1], [], []>} : vector<128x512xf32>, vector<512x128xf32>, vector<128x128xf32> -> vector<128x128xf32>
    %10 = arith.addf %4, %9 : vector<128x128xf32>
    %c0_9 = arith.constant 0 : index
    %c0_10 = arith.constant 0 : index
    %c0_11 = arith.constant 0 : index
    %11 = vector.load %arg4[%c0_9, %c0_10, %c0_11] : memref<1x128x128xf32, #tpu.memory_space<vmem>>, vector<1x128x128xf32>
    %12 = vector.shape_cast %11 : vector<1x128x128xf32> to vector<128x128xf32>
    %13 = vector.shape_cast %10 : vector<128x128xf32> to vector<1x128x128xf32>
    tpu.vector_store %arg4[%c0_9, %c0_10, %c0_11], %13 {strides = array<i32>} : memref<1x128x128xf32, #tpu.memory_space<vmem>>, vector<1x128x128xf32>,
    return
  }
  func.func @transform_0(%arg0: i32, %arg1: i32) -> (i32, i32, i32) {
    %c0_i32 = arith.constant 0 : i32
    %c0_i32_0 = arith.constant 0 : i32
    return %arg0, %c0_i32, %arg1 : i32, i32, i32
  }
  func.func @transform_1(%arg0: i32, %arg1: i32) -> (i32, i32, i32) {
    %c0_i32 = arith.constant 0 : i32
    %c0_i32_0 = arith.constant 0 : i32
    return %arg0, %arg1, %c0_i32 : i32, i32, i32
  }
  func.func @transform_2(%arg0: i32, %arg1: i32) -> (i32, i32, i32) {
    %c0_i32 = arith.constant 0 : i32
    %c0_i32_0 = arith.constant 0 : i32
    %c0_i32_1 = arith.constant 0 : i32
    return %arg0, %c0_i32, %c0_i32_0 : i32, i32, i32
  }
}

</mosaic_0001>

<llo_original>
// kernel: tpu_custom_call.1
$region0: #{tpu_custom_call.1}
  #allocation0 [shape = 'u32[]', space=smem, size = 0x4, offset = 0x4, fixed_abs, tag = 'smem constant byte address 0x4 - core index']
  #allocation1 [shape = 'u32[144,128]{1,0:T(1,128)}', space=vmem, size = 0x12000, scoped, tag = 'internal scratch']
  %s0 = inlined_call_operand.hbm [shape: f32[2,128,512], index: 0, kind: input, shape index: {}]
  %s1 = inlined_call_operand.hbm [shape: f32[2,512,128], index: 1, kind: input, shape index: {}]
  %s2 = inlined_call_operand.hbm [shape: f32[2,128,128], index: 2, kind: output, shape index: {}]
  %s3 = sld [smem:[#allocation0]]
  $region53: #{tpu_custom_call.1} parent=0
    _
  %s5 = ssub.s32 1, %s3
  %s6 = scalar_select 0, %s5, %s3
  $region1: #{tpu_custom_call.1} parent=0
    #allocation2 [shape = 'u8[524288]{0}', space=vmem, size = 0x80000, scoped, tag = 'input window, operand 0']
    #allocation3 [shape = 's32[2]{0}', space=sflag, size = 0x8, scoped, tag = 'scoped memory for tpu_custom_call.1']
    #allocation4 [shape = 's32[2]{0}', space=sflag, size = 0x8, scoped, tag = 'scoped memory for tpu_custom_call.1']
    #allocation5 [shape = 'u8[524288]{0}', space=vmem, size = 0x80000, scoped, tag = 'input window, operand 1']
    #allocation6 [shape = 's32[2]{0}', space=sflag, size = 0x8, scoped, tag = 'scoped memory for tpu_custom_call.1']
    #allocation7 [shape = 'u8[131072]{0}', space=vmem, size = 0x20000, scoped, tag = 'output window, operand 0']
    %7 = vsyncpa [#allocation3], 0
    %s8 = scalar_lea.sflag [#allocation3], 1
    %9 = vsyncpa %s8, 0
    %10 = vsyncpa [#allocation6], 0
    %s11 = scalar_lea.sflag [#allocation6], 1
    %12 = vsyncpa %s11, 0
    %13 = vsyncpa [#allocation4], 0
    %s14 = scalar_lea.sflag [#allocation4], 1
    %15 = vsyncpa %s14, 0
    loop: start=0, step=1, limit=4
    $region2: #{tpu_custom_call.1} parent=1 // loop_pre_header
      _
    $region3: #{tpu_custom_call.1} parent=1 // loop_header
      %s17 = sphi 0, %s21
      %p18 = scmp.ge.s32.totalorder %s17, 4
      %s24 = sphi 0, %s36
      %s25 = sphi 0, %s32
      %s26 = sphi 0, %s24
      %s27 = sphi 0, %s25
      %s28 = sphi 0, %s26
      %s29 = sphi 0, %s27
      %s41 = sphi 0, %s43
      %s44 = sphi 0, %s41
      %s45 = sphi 0, %s44
      %s61 = sphi 0, %s45
      %s69 = sphi 0, %s71
      %s72 = sphi 0, %s69
      %s73 = sphi 0, %s72
      %s89 = sphi 0, %s73
      %s95 = sphi 0, %s97
      %s98 = sphi 0, %s95
      %s99 = sphi 0, %s98
      %s115 = sphi 0, %s99
    $region4: #{tpu_custom_call.1} parent=1 // loop_header_branch
      %20 = sbr.rel (%p18) target = $region8
    $region5: #{tpu_custom_call.1} parent=1 // loop_body
      %s22 = ssub.s32 %s17, 1
      %s23 = ssub.s32 %s17, 2
      %s30 = sadd.s32 1, %s25
      %p31 = scmp.ge.s32.totalorder %s30, 1
      %s32 = scalar_select %p31, 0, %s30
      %s33 = sadd.s32 1, %s24
      %s34 = scalar_select %p31, %s33, %s24
      %p35 = scmp.ge.s32.totalorder %s34, 2
      %s36 = scalar_select %p35, 0, %s34
      %s37 = ssub.s32 %s24, %s36
      %s38 = ssub.s32 %s25, %s32
      %s39 = sor.u32 %s37, %s38
      %p40 = scmp.eq.s32.totalorder %s39, 0
      %s42 = sadd.s32 %s41, 1
      %s43 = scalar_select %p40, %s41, %s42
      %p46 = pneg %p40
      %p47 = scmp.eq.s32.totalorder %s17, 1
      %p48 = por %p46, %p47
      %p49 = scmp.ne.s32.totalorder %s41, %s44
      %p50 = scmp.eq.s32.totalorder %s17, 0
      %p51 = por %p49, %p50
      %p52 = scmp.ne.s32.totalorder %s41, %s44
      %p53 = scmp.eq.s32.totalorder %s22, 1
      %p54 = por %p52, %p53
      %p55 = scmp.ne.s32.totalorder %s44, %s45
      %p56 = scmp.eq.s32.totalorder %s22, 0
      %p57 = por %p55, %p56
      %p58 = scmp.ne.s32.totalorder %s44, %s45
      %p59 = scmp.eq.s32.totalorder %s23, 1
      %p60 = por %p58, %p59
      %p62 = scmp.ne.s32.totalorder %s45, %s61
      %p63 = scmp.eq.s32.totalorder %s23, 0
      %p64 = por %p62, %p63
      %s65 = ssub.s32 %s24, %s36
      %s66 = ssub.s32 %s25, %s32
      %s67 = sor.u32 %s65, %s66
      %p68 = scmp.eq.s32.totalorder %s67, 0
      %s70 = sadd.s32 %s69, 1
      %s71 = scalar_select %p68, %s69, %s70
      %p74 = pneg %p68
      %p75 = scmp.eq.s32.totalorder %s17, 1
      %p76 = por %p74, %p75
      %p77 = scmp.ne.s32.totalorder %s69, %s72
      %p78 = scmp.eq.s32.totalorder %s17, 0
      %p79 = por %p77, %p78
      %p80 = scmp.ne.s32.totalorder %s69, %s72
      %p81 = scmp.eq.s32.totalorder %s22, 1
      %p82 = por %p80, %p81
      %p83 = scmp.ne.s32.totalorder %s72, %s73
      %p84 = scmp.eq.s32.totalorder %s22, 0
      %p85 = por %p83, %p84
      %p86 = scmp.ne.s32.totalorder %s72, %s73
      %p87 = scmp.eq.s32.totalorder %s23, 1
      %p88 = por %p86, %p87
      %p90 = scmp.ne.s32.totalorder %s73, %s89
      %p91 = scmp.eq.s32.totalorder %s23, 0
      %p92 = por %p90, %p91
      %s93 = ssub.s32 %s24, %s36
      %p94 = scmp.eq.s32.totalorder %s93, 0
      %s96 = sadd.s32 %s95, 1
      %s97 = scalar_select %p94, %s95, %s96
      %p100 = pneg %p94
      %p101 = scmp.eq.s32.totalorder %s17, 1
      %p102 = por %p100, %p101
      %p103 = scmp.ne.s32.totalorder %s95, %s98
      %p104 = scmp.eq.s32.totalorder %s17, 0
      %p105 = por %p103, %p104
      %p106 = scmp.ne.s32.totalorder %s95, %s98
      %p107 = scmp.eq.s32.totalorder %s22, 1
      %p108 = por %p106, %p107
      %p109 = scmp.ne.s32.totalorder %s98, %s99
      %p110 = scmp.eq.s32.totalorder %s22, 0
      %p111 = por %p109, %p110
      %p112 = scmp.ne.s32.totalorder %s98, %s99
      %p113 = scmp.eq.s32.totalorder %s23, 1
      %p114 = por %p112, %p113
      %p116 = scmp.ne.s32.totalorder %s99, %s115
      %p117 = scmp.eq.s32.totalorder %s23, 0
      %p118 = por %p116, %p117
      %p119 = scmp.le.s32.totalorder 1, %s17
      %p120 = scmp.lt.s32.totalorder %s17, 3
      %p121 = pnand %p119, %p120
      %p122 = pneg %p121
      // Predicated region
      $region9: #{tpu_custom_call.1} parent=5 // pred_check
        _
      $region10: #{tpu_custom_call.1} parent=5 // pred_check_branch
        %124 = sbr.rel (%p121) target = $region12
      $region11: #{tpu_custom_call.1} parent=5 // pred_region
        %s125 = ssub.s32 %s17, 1
      $region12: #{tpu_custom_call.1} parent=5 // pred_fallthru
        _
      %p126 = scmp.lt.s32.totalorder %s17, 2
      // Predicated region
      $region13: #{tpu_custom_call.1} parent=5 // pred_check
        %p127 = pneg %p126
      $region14: #{tpu_custom_call.1} parent=5 // pred_check_branch
        %129 = sbr.rel (%p127) target = $region16
      $region15: #{tpu_custom_call.1} parent=5 // pred_region
        // Predicated region
        $region17: #{tpu_custom_call.1} parent=15 // pred_check
          %p130 = pneg %p51
        $region18: #{tpu_custom_call.1} parent=15 // pred_check_branch
          %132 = sbr.rel (%p130) target = $region20
        $region19: #{tpu_custom_call.1} parent=15 // pred_region
          %s133 = sand.u32 %s41, 1
          %s134 = scalar_lea.sflag [#allocation3], %s133
          %s135 = sand.u32 %s41, 1
          %s136 = smul.addr %s135, 512
          %s137 = scalar_lea.vmem [#allocation2], %s136
          %s138 = smul.u32 4, %s25
          %s140 = ssub.s32 8192, 8192
          %141 = vsyncadd %s134, %s140
          %s142 = smul.addr %s24, 64
          %s143 = sadd.s32 %s138, %s142
          %s144 = smul.addr %s143, 128
          %s145 = scalar_lea.hbm %s0, %s144
          %s146 = sshll.u32 %s137, 4
          %s147 = int_to_ptr.vmem [resolvable:$true] %s146
          %152 = dma.hbm_to_vmem [thread:$0]  %s145, 8192, %s147, %s134, 512, 512, 32
        $region20: #{tpu_custom_call.1} parent=15 // pred_fallthru
          _
        // Predicated region
        $region21: #{tpu_custom_call.1} parent=15 // pred_check
          %p153 = pneg %p79
        $region22: #{tpu_custom_call.1} parent=15 // pred_check_branch
          %155 = sbr.rel (%p153) target = $region24
        $region23: #{tpu_custom_call.1} parent=15 // pred_region
          %s156 = sand.u32 %s69, 1
          %s157 = scalar_lea.sflag [#allocation6], %s156
          %s158 = sand.u32 %s69, 1
          %s159 = smul.addr %s158, 512
          %s160 = scalar_lea.vmem [#allocation5], %s159
          %s161 = smul.u32 64, %s25
          %s163 = ssub.s32 8192, 8192
          %164 = vsyncadd %s157, %s163
          %s165 = smul.addr %s24, 64
          %s166 = sadd.s32 %s161, %s165
          %s167 = smul.addr %s166, 128
          %s168 = scalar_lea.hbm %s1, %s167
          %s169 = sshll.u32 %s160, 4
          %s170 = int_to_ptr.vmem [resolvable:$true] %s169
          %175 = dma.hbm_to_vmem [thread:$0]  %s168, 8192, %s170, %s157, 128, 128, 8
        $region24: #{tpu_custom_call.1} parent=15 // pred_fallthru
          _
      $region16: #{tpu_custom_call.1} parent=5 // pred_fallthru
        _
      %p176 = scmp.le.s32.totalorder 1, %s17
      %p177 = scmp.lt.s32.totalorder %s17, 3
      %p178 = pnand %p176, %p177
      %p179 = pneg %p178
      // Predicated region
      $region25: #{tpu_custom_call.1} parent=5 // pred_check
        _
      $region26: #{tpu_custom_call.1} parent=5 // pred_check_branch
        %181 = sbr.rel (%p178) target = $region28
      $region27: #{tpu_custom_call.1} parent=5 // pred_region
        %s182 = ssub.s32 %s17, 1
        %s183 = sand.u32 %s44, 1
        %s184 = scalar_lea.sflag [#allocation3], %s183
        %s185 = sand.u32 %s44, 1
        %s186 = smul.addr %s185, 512
        %s187 = scalar_lea.vmem [#allocation2], %s186
        // Predicated region
        $region29: #{tpu_custom_call.1} parent=27 // pred_check
          %p188 = pneg %p57
        $region30: #{tpu_custom_call.1} parent=27 // pred_check_branch
          %190 = sbr.rel (%p188) target = $region32
        $region31: #{tpu_custom_call.1} parent=27 // pred_region
          %191 = dma.done %s184, 8192
        $region32: #{tpu_custom_call.1} parent=27 // pred_fallthru
          _
        %s192 = sand.u32 %s72, 1
        %s193 = scalar_lea.sflag [#allocation6], %s192
        %s194 = sand.u32 %s72, 1
        %s195 = smul.addr %s194, 512
        %s196 = scalar_lea.vmem [#allocation5], %s195
        // Predicated region
        $region33: #{tpu_custom_call.1} parent=27 // pred_check
          %p197 = pneg %p85
        $region34: #{tpu_custom_call.1} parent=27 // pred_check_branch
          %199 = sbr.rel (%p197) target = $region36
        $region35: #{tpu_custom_call.1} parent=27 // pred_region
          %200 = dma.done %s193, 8192
        $region36: #{tpu_custom_call.1} parent=27 // pred_fallthru
          _
        %s201 = sand.u32 %s44, 1
        %s202 = scalar_lea.sflag [#allocation3], %s201
        %s203 = sand.u32 %s44, 1
        %s204 = smul.addr %s203, 512
        %s205 = scalar_lea.vmem [#allocation2], %s204
        %p206 = pneg %p57
        %p207 = pneg %p54
        %s208 = sand.u32 %s72, 1
        %s209 = scalar_lea.sflag [#allocation6], %s208
        %s210 = sand.u32 %s72, 1
        %s211 = smul.addr %s210, 512
        %s212 = scalar_lea.vmem [#allocation5], %s211
        %p213 = pneg %p85
        %p214 = pneg %p82
        %p215 = pneg %p111
        %p216 = pneg %p108
        %s217 = sand.u32 %s98, 1
        %s218 = scalar_lea.sflag [#allocation4], %s217
        %s219 = sand.u32 %s98, 1
        %s220 = smul.addr %s219, 128
        %s221 = scalar_lea.vmem [#allocation7], %s220
        %s222 = smul.u32 4, %s27
        %s223 = smul.u32 64, %s27
        %p224 = scmp.eq.s32.totalorder %s27, 0
        // Predicated region
        $region37: #{tpu_custom_call.1} parent=27 // pred_check
          %p225 = pneg %p224
        $region38: #{tpu_custom_call.1} parent=27 // pred_check_branch
          %227 = sbr.rel (%p225) target = $region40
        $region39: #{tpu_custom_call.1} parent=27 // pred_region
          %228 = vst [vmem:[%s221] sm:$0xff] 0.0
          %229 = vst [vmem:[%s221 + $0x8] sm:$0xff] 0.0
          %230 = vst [vmem:[%s221 + $0x10] sm:$0xff] 0.0
          %231 = vst [vmem:[%s221 + $0x18] sm:$0xff] 0.0
          %232 = vst [vmem:[%s221 + $0x20] sm:$0xff] 0.0
          %233 = vst [vmem:[%s221 + $0x28] sm:$0xff] 0.0
          %234 = vst [vmem:[%s221 + $0x30] sm:$0xff] 0.0
          %235 = vst [vmem:[%s221 + $0x38] sm:$0xff] 0.0
          %236 = vst [vmem:[%s221 + $0x40] sm:$0xff] 0.0
          %237 = vst [vmem:[%s221 + $0x48] sm:$0xff] 0.0
          %238 = vst [vmem:[%s221 + $0x50] sm:$0xff] 0.0
          %239 = vst [vmem:[%s221 + $0x58] sm:$0xff] 0.0
          %240 = vst [vmem:[%s221 + $0x60] sm:$0xff] 0.0
          %241 = vst [vmem:[%s221 + $0x68] sm:$0xff] 0.0
          %242 = vst [vmem:[%s221 + $0x70] sm:$0xff] 0.0
          %243 = vst [vmem:[%s221 + $0x78] sm:$0xff] 0.0
        $region40: #{tpu_custom_call.1} parent=27 // pred_fallthru
          _
        %v244 = vld [vmem:[%s221] sm:$0xff]
        %v245 = vld [vmem:[%s221 + $0x8] sm:$0xff]
        %v246 = vld [vmem:[%s221 + $0x10] sm:$0xff]
        %v247 = vld [vmem:[%s221 + $0x18] sm:$0xff]
        %v248 = vld [vmem:[%s221 + $0x20] sm:$0xff]
        %v249 = vld [vmem:[%s221 + $0x28] sm:$0xff]
        %v250 = vld [vmem:[%s221 + $0x30] sm:$0xff]
        %v251 = vld [vmem:[%s221 + $0x38] sm:$0xff]
        %v252 = vld [vmem:[%s221 + $0x40] sm:$0xff]
        %v253 = vld [vmem:[%s221 + $0x48] sm:$0xff]
        %v254 = vld [vmem:[%s221 + $0x50] sm:$0xff]
        %v255 = vld [vmem:[%s221 + $0x58] sm:$0xff]
        %v256 = vld [vmem:[%s221 + $0x60] sm:$0xff]
        %v257 = vld [vmem:[%s221 + $0x68] sm:$0xff]
        %v258 = vld [vmem:[%s221 + $0x70] sm:$0xff]
        %v259 = vld [vmem:[%s221 + $0x78] sm:$0xff]
        %v260 = vld [vmem:[%s187] sm:$0xff]
        %v261 = vld [vmem:[%s187 + $0x8] sm:$0xff]
        %v262 = vld [vmem:[%s187 + $0x10] sm:$0xff]
        %v263 = vld [vmem:[%s187 + $0x18] sm:$0xff]
        %v264 = vld [vmem:[%s187 + $0x20] sm:$0xff]
        %v265 = vld [vmem:[%s187 + $0x28] sm:$0xff]
        %v266 = vld [vmem:[%s187 + $0x30] sm:$0xff]
        %v267 = vld [vmem:[%s187 + $0x38] sm:$0xff]
        %v268 = vld [vmem:[%s187 + $0x40] sm:$0xff]
        %v269 = vld [vmem:[%s187 + $0x48] sm:$0xff]
        %v270 = vld [vmem:[%s187 + $0x50] sm:$0xff]
        %v271 = vld [vmem:[%s187 + $0x58] sm:$0xff]
        %v272 = vld [vmem:[%s187 + $0x60] sm:$0xff]
        %v273 = vld [vmem:[%s187 + $0x68] sm:$0xff]
        %v274 = vld [vmem:[%s187 + $0x70] sm:$0xff]
        %v275 = vld [vmem:[%s187 + $0x78] sm:$0xff]
        %v276 = vld [vmem:[%s187 + $0x80] sm:$0xff]
        %v277 = vld [vmem:[%s187 + $0x88] sm:$0xff]
        %v278 = vld [vmem:[%s187 + $0x90] sm:$0xff]
        %v279 = vld [vmem:[%s187 + $0x98] sm:$0xff]
        %v280 = vld [vmem:[%s187 + $0xa0] sm:$0xff]
        %v281 = vld [vmem:[%s187 + $0xa8] sm:$0xff]
        %v282 = vld [vmem:[%s187 + $0xb0] sm:$0xff]
        %v283 = vld [vmem:[%s187 + $0xb8] sm:$0xff]
        %v284 = vld [vmem:[%s187 + $0xc0] sm:$0xff]
        %v285 = vld [vmem:[%s187 + $0xc8] sm:$0xff]
        %v286 = vld [vmem:[%s187 + $0xd0] sm:$0xff]
        %v287 = vld [vmem:[%s187 + $0xd8] sm:$0xff]
        %v288 = vld [vmem:[%s187 + $0xe0] sm:$0xff]
        %v289 = vld [vmem:[%s187 + $0xe8] sm:$0xff]
        %v290 = vld [vmem:[%s187 + $0xf0] sm:$0xff]
        %v291 = vld [vmem:[%s187 + $0xf8] sm:$0xff]
        %v292 = vld [vmem:[%s187 + $0x100] sm:$0xff]
        %v293 = vld [vmem:[%s187 + $0x108] sm:$0xff]
        %v294 = vld [vmem:[%s187 + $0x110] sm:$0xff]
        %v295 = vld [vmem:[%s187 + $0x118] sm:$0xff]
        %v296 = vld [vmem:[%s187 + $0x120] sm:$0xff]
        %v297 = vld [vmem:[%s187 + $0x128] sm:$0xff]
        %v298 = vld [vmem:[%s187 + $0x130] sm:$0xff]
        %v299 = vld [vmem:[%s187 + $0x138] sm:$0xff]
        %v300 = vld [vmem:[%s187 + $0x140] sm:$0xff]
        %v301 = vld [vmem:[%s187 + $0x148] sm:$0xff]
        %v302 = vld [vmem:[%s187 + $0x150] sm:$0xff]
        %v303 = vld [vmem:[%s187 + $0x158] sm:$0xff]
        %v304 = vld [vmem:[%s187 + $0x160] sm:$0xff]
        %v305 = vld [vmem:[%s187 + $0x168] sm:$0xff]
        %v306 = vld [vmem:[%s187 + $0x170] sm:$0xff]
        %v307 = vld [vmem:[%s187 + $0x178] sm:$0xff]
        %v308 = vld [vmem:[%s187 + $0x180] sm:$0xff]
        %v309 = vld [vmem:[%s187 + $0x188] sm:$0xff]
        %v310 = vld [vmem:[%s187 + $0x190] sm:$0xff]
        %v311 = vld [vmem:[%s187 + $0x198] sm:$0xff]
        %v312 = vld [vmem:[%s187 + $0x1a0] sm:$0xff]
        %v313 = vld [vmem:[%s187 + $0x1a8] sm:$0xff]
        %v314 = vld [vmem:[%s187 + $0x1b0] sm:$0xff]
        %v315 = vld [vmem:[%s187 + $0x1b8] sm:$0xff]
        %v316 = vld [vmem:[%s187 + $0x1c0] sm:$0xff]
        %v317 = vld [vmem:[%s187 + $0x1c8] sm:$0xff]
        %v318 = vld [vmem:[%s187 + $0x1d0] sm:$0xff]
        %v319 = vld [vmem:[%s187 + $0x1d8] sm:$0xff]
        %v320 = vld [vmem:[%s187 + $0x1e0] sm:$0xff]
        %v321 = vld [vmem:[%s187 + $0x1e8] sm:$0xff]
        %v322 = vld [vmem:[%s187 + $0x1f0] sm:$0xff]
        %v323 = vld [vmem:[%s187 + $0x1f8] sm:$0xff]
        %v324 = vld [vmem:[%s196] sm:$0xff]
        %v325 = vld [vmem:[%s196 + $0x8] sm:$0xff]
        %v326 = vld [vmem:[%s196 + $0x10] sm:$0xff]
        %v327 = vld [vmem:[%s196 + $0x18] sm:$0xff]
        %v328 = vld [vmem:[%s196 + $0x20] sm:$0xff]
        %v329 = vld [vmem:[%s196 + $0x28] sm:$0xff]
        %v330 = vld [vmem:[%s196 + $0x30] sm:$0xff]
        %v331 = vld [vmem:[%s196 + $0x38] sm:$0xff]
        %v332 = vld [vmem:[%s196 + $0x40] sm:$0xff]
        %v333 = vld [vmem:[%s196 + $0x48] sm:$0xff]
        %v334 = vld [vmem:[%s196 + $0x50] sm:$0xff]
        %v335 = vld [vmem:[%s196 + $0x58] sm:$0xff]
        %v336 = vld [vmem:[%s196 + $0x60] sm:$0xff]
        %v337 = vld [vmem:[%s196 + $0x68] sm:$0xff]
        %v338 = vld [vmem:[%s196 + $0x70] sm:$0xff]
        %v339 = vld [vmem:[%s196 + $0x78] sm:$0xff]
        %v340 = vld [vmem:[%s196 + $0x80] sm:$0xff]
        %v341 = vld [vmem:[%s196 + $0x88] sm:$0xff]
        %v342 = vld [vmem:[%s196 + $0x90] sm:$0xff]
        %v343 = vld [vmem:[%s196 + $0x98] sm:$0xff]
        %v344 = vld [vmem:[%s196 + $0xa0] sm:$0xff]
        %v345 = vld [vmem:[%s196 + $0xa8] sm:$0xff]
        %v346 = vld [vmem:[%s196 + $0xb0] sm:$0xff]
        %v347 = vld [vmem:[%s196 + $0xb8] sm:$0xff]
        %v348 = vld [vmem:[%s196 + $0xc0] sm:$0xff]
        %v349 = vld [vmem:[%s196 + $0xc8] sm:$0xff]
        %v350 = vld [vmem:[%s196 + $0xd0] sm:$0xff]
        %v351 = vld [vmem:[%s196 + $0xd8] sm:$0xff]
        %v352 = vld [vmem:[%s196 + $0xe0] sm:$0xff]
        %v353 = vld [vmem:[%s196 + $0xe8] sm:$0xff]
        %v354 = vld [vmem:[%s196 + $0xf0] sm:$0xff]
        %v355 = vld [vmem:[%s196 + $0xf8] sm:$0xff]
        %v356 = vld [vmem:[%s196 + $0x100] sm:$0xff]
        %v357 = vld [vmem:[%s196 + $0x108] sm:$0xff]
        %v358 = vld [vmem:[%s196 + $0x110] sm:$0xff]
        %v359 = vld [vmem:[%s196 + $0x118] sm:$0xff]
        %v360 = vld [vmem:[%s196 + $0x120] sm:$0xff]
        %v361 = vld [vmem:[%s196 + $0x128] sm:$0xff]
        %v362 = vld [vmem:[%s196 + $0x130] sm:$0xff]
        %v363 = vld [vmem:[%s196 + $0x138] sm:$0xff]
        %v364 = vld [vmem:[%s196 + $0x140] sm:$0xff]
        %v365 = vld [vmem:[%s196 + $0x148] sm:$0xff]
        %v366 = vld [vmem:[%s196 + $0x150] sm:$0xff]
        %v367 = vld [vmem:[%s196 + $0x158] sm:$0xff]
        %v368 = vld [vmem:[%s196 + $0x160] sm:$0xff]
        %v369 = vld [vmem:[%s196 + $0x168] sm:$0xff]
        %v370 = vld [vmem:[%s196 + $0x170] sm:$0xff]
        %v371 = vld [vmem:[%s196 + $0x178] sm:$0xff]
        %v372 = vld [vmem:[%s196 + $0x180] sm:$0xff]
        %v373 = vld [vmem:[%s196 + $0x188] sm:$0xff]
        %v374 = vld [vmem:[%s196 + $0x190] sm:$0xff]
        %v375 = vld [vmem:[%s196 + $0x198] sm:$0xff]
        %v376 = vld [vmem:[%s196 + $0x1a0] sm:$0xff]
        %v377 = vld [vmem:[%s196 + $0x1a8] sm:$0xff]
        %v378 = vld [vmem:[%s196 + $0x1b0] sm:$0xff]
        %v379 = vld [vmem:[%s196 + $0x1b8] sm:$0xff]
        %v380 = vld [vmem:[%s196 + $0x1c0] sm:$0xff]
        %v381 = vld [vmem:[%s196 + $0x1c8] sm:$0xff]
        %v382 = vld [vmem:[%s196 + $0x1d0] sm:$0xff]
        %v383 = vld [vmem:[%s196 + $0x1d8] sm:$0xff]
        %v384 = vld [vmem:[%s196 + $0x1e0] sm:$0xff]
        %v385 = vld [vmem:[%s196 + $0x1e8] sm:$0xff]
        %v386 = vld [vmem:[%s196 + $0x1f0] sm:$0xff]
        %v387 = vld [vmem:[%s196 + $0x1f8] sm:$0xff]
        %388 = vmatprep.subr.mxu0 0.0
        %389 = vmatpush1.msra.mxu0 %v339
        %390 = vmatprep.subr.mxu0 0.0
        %391 = vmatpush1.msra.mxu0 %v338
        %392 = vmatprep.subr.mxu0 0.0
        %393 = vmatpush1.msra.mxu0 %v337
        %394 = vmatprep.subr.mxu0 0.0
        %395 = vmatpush1.msra.mxu0 %v336
        %396 = vmatprep.subr.mxu0 0.0
        %397 = vmatpush1.msra.mxu0 %v335
        %398 = vmatprep.subr.mxu0 0.0
        %399 = vmatpush1.msra.mxu0 %v334
        %400 = vmatprep.subr.mxu0 0.0
        %401 = vmatpush1.msra.mxu0 %v333
        %402 = vmatprep.subr.mxu0 0.0
        %403 = vmatpush1.msra.mxu0 %v332
        %404 = vmatprep.subr.mxu0 0.0
        %405 = vmatpush1.msra.mxu0 %v331
        %406 = vmatprep.subr.mxu0 0.0
        %407 = vmatpush1.msra.mxu0 %v330
        %408 = vmatprep.subr.mxu0 0.0
        %409 = vmatpush1.msra.mxu0 %v329
        %410 = vmatprep.subr.mxu0 0.0
        %411 = vmatpush1.msra.mxu0 %v328
        %412 = vmatprep.subr.mxu0 0.0
        %413 = vmatpush1.msra.mxu0 %v327
        %414 = vmatprep.subr.mxu0 0.0
        %415 = vmatpush1.msra.mxu0 %v326
        %416 = vmatprep.subr.mxu0 0.0
        %417 = vmatpush1.msra.mxu0 %v325
        %418 = vmatprep.subr.mxu0 0.0
        %419 = vmatpush1.msra.mxu0 %v324
        %420 = vmatprep.subr.mxu0 0.0
        %421 = vmatpush2.msra.mxu0 %v355
        %422 = vmatprep.subr.mxu0 0.0
        %423 = vmatpush2.msra.mxu0 %v354
        %424 = vmatprep.subr.mxu0 0.0
        %425 = vmatpush2.msra.mxu0 %v353
        %426 = vmatprep.subr.mxu0 0.0
        %427 = vmatpush2.msra.mxu0 %v352
        %428 = vmatprep.subr.mxu0 0.0
        %429 = vmatpush2.msra.mxu0 %v351
        %430 = vmatprep.subr.mxu0 0.0
        %431 = vmatpush2.msra.mxu0 %v350
        %432 = vmatprep.subr.mxu0 0.0
        %433 = vmatpush2.msra.mxu0 %v349
        %434 = vmatprep.subr.mxu0 0.0
        %435 = vmatpush2.msra.mxu0 %v348
        %436 = vmatprep.subr.mxu0 0.0
        %437 = vmatpush2.msra.mxu0 %v347
        %438 = vmatprep.subr.mxu0 0.0
        %439 = vmatpush2.msra.mxu0 %v346
        %440 = vmatprep.subr.mxu0 0.0
        %441 = vmatpush2.msra.mxu0 %v345
        %442 = vmatprep.subr.mxu0 0.0
        %443 = vmatpush2.msra.mxu0 %v344
        %444 = vmatprep.subr.mxu0 0.0
        %445 = vmatpush2.msra.mxu0 %v343
        %446 = vmatprep.subr.mxu0 0.0
        %447 = vmatpush2.msra.mxu0 %v342
        %448 = vmatprep.subr.mxu0 0.0
        %449 = vmatpush2.msra.mxu0 %v341
        %450 = vmatprep.subr.mxu0 0.0
        %451 = vmatpush2.msra.mxu0 %v340
        %452 = vmatprep.mubr.f32.mxu0 %v261
        %453 = vmatmul.mubr.f32.gmra.mxu0 %v260
        %v454 = vpop.f32.mrf.mxu0
        %v455 = vadd.f32 0.0, %v454
        %v456 = vpop.f32.mrf.mxu0
        %457 = vmatprep.mubr.f32.mxu0 %v265
        %458 = vmatmul.mubr.f32.gmra.mxu0 %v264
        %v459 = vpop.f32.mrf.mxu0
        %v460 = vadd.f32 0.0, %v459
        %v461 = vpop.f32.mrf.mxu0
        %462 = vmatprep.mubr.f32.mxu0 %v269
        %463 = vmatmul.mubr.f32.gmra.mxu0 %v268
        %v464 = vpop.f32.mrf.mxu0
        %v465 = vadd.f32 0.0, %v464
        %v466 = vpop.f32.mrf.mxu0
        %467 = vmatprep.mubr.f32.mxu0 %v273
        %468 = vmatmul.mubr.f32.gmra.mxu0 %v272
        %v469 = vpop.f32.mrf.mxu0
        %v470 = vadd.f32 0.0, %v469
        %v471 = vpop.f32.mrf.mxu0
        %472 = vmatprep.mubr.f32.mxu0 %v277
        %473 = vmatmul.mubr.f32.gmra.mxu0 %v276
        %v474 = vpop.f32.mrf.mxu0
        %v475 = vadd.f32 0.0, %v474
        %v476 = vpop.f32.mrf.mxu0
        %477 = vmatprep.mubr.f32.mxu0 %v281
        %478 = vmatmul.mubr.f32.gmra.mxu0 %v280
        %v479 = vpop.f32.mrf.mxu0
        %v480 = vadd.f32 0.0, %v479
        %v481 = vpop.f32.mrf.mxu0
        %482 = vmatprep.mubr.f32.mxu0 %v285
        %483 = vmatmul.mubr.f32.gmra.mxu0 %v284
        %v484 = vpop.f32.mrf.mxu0
        %v485 = vadd.f32 0.0, %v484
        %v486 = vpop.f32.mrf.mxu0
        %487 = vmatprep.mubr.f32.mxu0 %v289
        %488 = vmatmul.mubr.f32.gmra.mxu0 %v288
        %v489 = vpop.f32.mrf.mxu0
        %v490 = vadd.f32 0.0, %v489
        %v491 = vpop.f32.mrf.mxu0
        %492 = vmatprep.mubr.f32.mxu0 %v293
        %493 = vmatmul.mubr.f32.gmra.mxu0 %v292
        %v494 = vpop.f32.mrf.mxu0
        %v495 = vadd.f32 0.0, %v494
        %v496 = vpop.f32.mrf.mxu0
        %497 = vmatprep.mubr.f32.mxu0 %v297
        %498 = vmatmul.mubr.f32.gmra.mxu0 %v296
        %v499 = vpop.f32.mrf.mxu0
        %v500 = vadd.f32 0.0, %v499
        %v501 = vpop.f32.mrf.mxu0
        %502 = vmatprep.mubr.f32.mxu0 %v301
        %503 = vmatmul.mubr.f32.gmra.mxu0 %v300
        %v504 = vpop.f32.mrf.mxu0
        %v505 = vadd.f32 0.0, %v504
        %v506 = vpop.f32.mrf.mxu0
        %507 = vmatprep.mubr.f32.mxu0 %v305
        %508 = vmatmul.mubr.f32.gmra.mxu0 %v304
        %v509 = vpop.f32.mrf.mxu0
        %v510 = vadd.f32 0.0, %v509
        %v511 = vpop.f32.mrf.mxu0
        %512 = vmatprep.mubr.f32.mxu0 %v309
        %513 = vmatmul.mubr.f32.gmra.mxu0 %v308
        %v514 = vpop.f32.mrf.mxu0
        %v515 = vadd.f32 0.0, %v514
        %v516 = vpop.f32.mrf.mxu0
        %517 = vmatprep.mubr.f32.mxu0 %v313
        %518 = vmatmul.mubr.f32.gmra.mxu0 %v312
        %v519 = vpop.f32.mrf.mxu0
        %v520 = vadd.f32 0.0, %v519
        %v521 = vpop.f32.mrf.mxu0
        %522 = vmatprep.mubr.f32.mxu0 %v317
        %523 = vmatmul.mubr.f32.gmra.mxu0 %v316
        %v524 = vpop.f32.mrf.mxu0
        %v525 = vadd.f32 0.0, %v524
        %v526 = vpop.f32.mrf.mxu0
        %527 = vmatprep.mubr.f32.mxu0 %v321
        %528 = vmatmul.mubr.f32.gmra.mxu0 %v320
        %v529 = vpop.f32.mrf.mxu0
        %v530 = vadd.f32 0.0, %v529
        %v531 = vpop.f32.mrf.mxu0
        %532 = vdwg.mxu0
        %533 = vmatprep.subr.mxu0 0.0
        %534 = vmatpush1.msra.mxu0 %v371
        %535 = vmatprep.subr.mxu0 0.0
        %536 = vmatpush1.msra.mxu0 %v370
        %537 = vmatprep.subr.mxu0 0.0
        %538 = vmatpush1.msra.mxu0 %v369
        %539 = vmatprep.subr.mxu0 0.0
        %540 = vmatpush1.msra.mxu0 %v368
        %541 = vmatprep.subr.mxu0 0.0
        %542 = vmatpush1.msra.mxu0 %v367
        %543 = vmatprep.subr.mxu0 0.0
        %544 = vmatpush1.msra.mxu0 %v366
        %545 = vmatprep.subr.mxu0 0.0
        %546 = vmatpush1.msra.mxu0 %v365
        %547 = vmatprep.subr.mxu0 0.0
        %548 = vmatpush1.msra.mxu0 %v364
        %549 = vmatprep.subr.mxu0 0.0
        %550 = vmatpush1.msra.mxu0 %v363
        %551 = vmatprep.subr.mxu0 0.0
        %552 = vmatpush1.msra.mxu0 %v362
        %553 = vmatprep.subr.mxu0 0.0
        %554 = vmatpush1.msra.mxu0 %v361
        %555 = vmatprep.subr.mxu0 0.0
        %556 = vmatpush1.msra.mxu0 %v360
        %557 = vmatprep.subr.mxu0 0.0
        %558 = vmatpush1.msra.mxu0 %v359
        %559 = vmatprep.subr.mxu0 0.0
        %560 = vmatpush1.msra.mxu0 %v358
        %561 = vmatprep.subr.mxu0 0.0
        %562 = vmatpush1.msra.mxu0 %v357
        %563 = vmatprep.subr.mxu0 0.0
        %564 = vmatpush1.msra.mxu0 %v356
        %565 = vmatprep.subr.mxu0 0.0
        %566 = vmatpush2.msra.mxu0 %v387
        %567 = vmatprep.subr.mxu0 0.0
        %568 = vmatpush2.msra.mxu0 %v386
        %569 = vmatprep.subr.mxu0 0.0
        %570 = vmatpush2.msra.mxu0 %v385
        %571 = vmatprep.subr.mxu0 0.0
        %572 = vmatpush2.msra.mxu0 %v384
        %573 = vmatprep.subr.mxu0 0.0
        %574 = vmatpush2.msra.mxu0 %v383
        %575 = vmatprep.subr.mxu0 0.0
        %576 = vmatpush2.msra.mxu0 %v382
        %577 = vmatprep.subr.mxu0 0.0
        %578 = vmatpush2.msra.mxu0 %v381
        %579 = vmatprep.subr.mxu0 0.0
        %580 = vmatpush2.msra.mxu0 %v380
        %581 = vmatprep.subr.mxu0 0.0
        %582 = vmatpush2.msra.mxu0 %v379
        %583 = vmatprep.subr.mxu0 0.0
        %584 = vmatpush2.msra.mxu0 %v378
        %585 = vmatprep.subr.mxu0 0.0
        %586 = vmatpush2.msra.mxu0 %v377
        %587 = vmatprep.subr.mxu0 0.0
        %588 = vmatpush2.msra.mxu0 %v376
        %589 = vmatprep.subr.mxu0 0.0
        %590 = vmatpush2.msra.mxu0 %v375
        %591 = vmatprep.subr.mxu0 0.0
        %592 = vmatpush2.msra.mxu0 %v374
        %593 = vmatprep.subr.mxu0 0.0
        %594 = vmatpush2.msra.mxu0 %v373
        %595 = vmatprep.subr.mxu0 0.0
        %596 = vmatpush2.msra.mxu0 %v372
        %597 = vmatprep.mubr.f32.mxu0 %v263
        %598 = vmatmul.mubr.f32.gmra.mxu0 %v262
        %v599 = vpop.f32.mrf.mxu0
        %v600 = vadd.f32 %v455, %v599
        %v601 = vpop.f32.mrf.mxu0
        %602 = vmatprep.mubr.f32.mxu0 %v267
        %603 = vmatmul.mubr.f32.gmra.mxu0 %v266
        %v604 = vpop.f32.mrf.mxu0
        %v605 = vadd.f32 %v460, %v604
        %v606 = vpop.f32.mrf.mxu0
        %607 = vmatprep.mubr.f32.mxu0 %v271
        %608 = vmatmul.mubr.f32.gmra.mxu0 %v270
        %v609 = vpop.f32.mrf.mxu0
        %v610 = vadd.f32 %v465, %v609
        %v611 = vpop.f32.mrf.mxu0
        %612 = vmatprep.mubr.f32.mxu0 %v275
        %613 = vmatmul.mubr.f32.gmra.mxu0 %v274
        %v614 = vpop.f32.mrf.mxu0
        %v615 = vadd.f32 %v470, %v614
        %v616 = vpop.f32.mrf.mxu0
        %617 = vmatprep.mubr.f32.mxu0 %v279
        %618 = vmatmul.mubr.f32.gmra.mxu0 %v278
        %v619 = vpop.f32.mrf.mxu0
        %v620 = vadd.f32 %v475, %v619
        %v621 = vpop.f32.mrf.mxu0
        %622 = vmatprep.mubr.f32.mxu0 %v283
        %623 = vmatmul.mubr.f32.gmra.mxu0 %v282
        %v624 = vpop.f32.mrf.mxu0
        %v625 = vadd.f32 %v480, %v624
        %v626 = vpop.f32.mrf.mxu0
        %627 = vmatprep.mubr.f32.mxu0 %v287
        %628 = vmatmul.mubr.f32.gmra.mxu0 %v286
        %v629 = vpop.f32.mrf.mxu0
        %v630 = vadd.f32 %v485, %v629
        %v631 = vpop.f32.mrf.mxu0
        %632 = vmatprep.mubr.f32.mxu0 %v291
        %633 = vmatmul.mubr.f32.gmra.mxu0 %v290
        %v634 = vpop.f32.mrf.mxu0
        %v635 = vadd.f32 %v490, %v634
        %v636 = vpop.f32.mrf.mxu0
        %637 = vmatprep.mubr.f32.mxu0 %v295
        %638 = vmatmul.mubr.f32.gmra.mxu0 %v294
        %v639 = vpop.f32.mrf.mxu0
        %v640 = vadd.f32 %v495, %v639
        %v641 = vpop.f32.mrf.mxu0
        %642 = vmatprep.mubr.f32.mxu0 %v299
        %643 = vmatmul.mubr.f32.gmra.mxu0 %v298
        %v644 = vpop.f32.mrf.mxu0
        %v645 = vadd.f32 %v500, %v644
        %v646 = vpop.f32.mrf.mxu0
        %647 = vmatprep.mubr.f32.mxu0 %v303
        %648 = vmatmul.mubr.f32.gmra.mxu0 %v302
        %v649 = vpop.f32.mrf.mxu0
        %v650 = vadd.f32 %v505, %v649
        %v651 = vpop.f32.mrf.mxu0
        %652 = vmatprep.mubr.f32.mxu0 %v307
        %653 = vmatmul.mubr.f32.gmra.mxu0 %v306
        %v654 = vpop.f32.mrf.mxu0
        %v655 = vadd.f32 %v510, %v654
        %v656 = vpop.f32.mrf.mxu0
        %657 = vmatprep.mubr.f32.mxu0 %v311
        %658 = vmatmul.mubr.f32.gmra.mxu0 %v310
        %v659 = vpop.f32.mrf.mxu0
        %v660 = vadd.f32 %v515, %v659
        %v661 = vpop.f32.mrf.mxu0
        %662 = vmatprep.mubr.f32.mxu0 %v315
        %663 = vmatmul.mubr.f32.gmra.mxu0 %v314
        %v664 = vpop.f32.mrf.mxu0
        %v665 = vadd.f32 %v520, %v664
        %v666 = vpop.f32.mrf.mxu0
        %667 = vmatprep.mubr.f32.mxu0 %v319
        %668 = vmatmul.mubr.f32.gmra.mxu0 %v318
        %v669 = vpop.f32.mrf.mxu0
        %v670 = vadd.f32 %v525, %v669
        %v671 = vpop.f32.mrf.mxu0
        %672 = vmatprep.mubr.f32.mxu0 %v323
        %673 = vmatmul.mubr.f32.gmra.mxu0 %v322
        %v674 = vpop.f32.mrf.mxu0
        %v675 = vadd.f32 %v530, %v674
        %v676 = vpop.f32.mrf.mxu0
        %677 = vdwg.mxu0
        %v678 = vadd.f32 %v244, %v600
        %v679 = vadd.f32 %v245, %v605
        %v680 = vadd.f32 %v246, %v610
        %v681 = vadd.f32 %v247, %v615
        %v682 = vadd.f32 %v248, %v620
        %v683 = vadd.f32 %v249, %v625
        %v684 = vadd.f32 %v250, %v630
        %v685 = vadd.f32 %v251, %v635
        %v686 = vadd.f32 %v252, %v640
        %v687 = vadd.f32 %v253, %v645
        %v688 = vadd.f32 %v254, %v650
        %v689 = vadd.f32 %v255, %v655
        %v690 = vadd.f32 %v256, %v660
        %v691 = vadd.f32 %v257, %v665
        %v692 = vadd.f32 %v258, %v670
        %v693 = vadd.f32 %v259, %v675
        %694 = vst [vmem:[%s221] sm:$0xff] %v678
        %695 = vst [vmem:[%s221 + $0x8] sm:$0xff] %v679
        %696 = vst [vmem:[%s221 + $0x10] sm:$0xff] %v680
        %697 = vst [vmem:[%s221 + $0x18] sm:$0xff] %v681
        %698 = vst [vmem:[%s221 + $0x20] sm:$0xff] %v682
        %699 = vst [vmem:[%s221 + $0x28] sm:$0xff] %v683
        %700 = vst [vmem:[%s221 + $0x30] sm:$0xff] %v684
        %701 = vst [vmem:[%s221 + $0x38] sm:$0xff] %v685
        %702 = vst [vmem:[%s221 + $0x40] sm:$0xff] %v686
        %703 = vst [vmem:[%s221 + $0x48] sm:$0xff] %v687
        %704 = vst [vmem:[%s221 + $0x50] sm:$0xff] %v688
        %705 = vst [vmem:[%s221 + $0x58] sm:$0xff] %v689
        %706 = vst [vmem:[%s221 + $0x60] sm:$0xff] %v690
        %707 = vst [vmem:[%s221 + $0x68] sm:$0xff] %v691
        %708 = vst [vmem:[%s221 + $0x70] sm:$0xff] %v692
        %709 = vst [vmem:[%s221 + $0x78] sm:$0xff] %v693
        %s710 = sand.u32 %s98, 1
        %s711 = scalar_lea.sflag [#allocation4], %s710
        %s712 = sand.u32 %s98, 1
        %s713 = smul.addr %s712, 128
        %s714 = scalar_lea.vmem [#allocation7], %s713
        // Predicated region
        $region41: #{tpu_custom_call.1} parent=27 // pred_check
          %p715 = pneg %p108
        $region42: #{tpu_custom_call.1} parent=27 // pred_check_branch
          %717 = sbr.rel (%p715) target = $region44
        $region43: #{tpu_custom_call.1} parent=27 // pred_region
          %s719 = ssub.s32 2048, 2048
          %720 = vsyncadd %s711, %s719
          %s721 = smul.addr %s26, 16
          %s722 = smul.addr %s721, 128
          %s723 = scalar_lea.hbm %s2, %s722
          %s724 = sshll.u32 %s714, 4
          %s725 = int_to_ptr.vmem [resolvable:$true] %s724
          %730 = dma.vmem_to_hbm [thread:$0]  %s725, 2048, %s723, %s711, 128, 128, 8
        $region44: #{tpu_custom_call.1} parent=27 // pred_fallthru
          _
      $region28: #{tpu_custom_call.1} parent=5 // pred_fallthru
        _
      %p731 = scmp.le.s32.totalorder 2, %s17
      // Predicated region
      $region45: #{tpu_custom_call.1} parent=5 // pred_check
        %p732 = pneg %p731
      $region46: #{tpu_custom_call.1} parent=5 // pred_check_branch
        %734 = sbr.rel (%p732) target = $region48
      $region47: #{tpu_custom_call.1} parent=5 // pred_region
        %s735 = ssub.s32 %s17, 2
        // Predicated region
        $region49: #{tpu_custom_call.1} parent=47 // pred_check
          %p736 = pneg %p114
        $region50: #{tpu_custom_call.1} parent=47 // pred_check_branch
          %738 = sbr.rel (%p736) target = $region52
        $region51: #{tpu_custom_call.1} parent=47 // pred_region
          %s739 = sand.u32 %s99, 1
          %s740 = scalar_lea.sflag [#allocation4], %s739
          %s741 = sand.u32 %s99, 1
          %s742 = smul.addr %s741, 128
          %s743 = scalar_lea.vmem [#allocation7], %s742
          %744 = dma.done %s740, 2048
        $region52: #{tpu_custom_call.1} parent=47 // pred_fallthru
          _
      $region48: #{tpu_custom_call.1} parent=5 // pred_fallthru
        _
    $region6: #{tpu_custom_call.1} parent=1 // loop_footer
      %s21 = sadd.s32 1, %s17
    $region7: #{tpu_custom_call.1} parent=1 // loop_footer_branch
      %16 = sbr.rel target = $region3
    $region8: #{tpu_custom_call.1} parent=1 // loop_exit
      _
    %745 = vsyncpa [#allocation3], 1
    %s746 = scalar_lea.sflag [#allocation3], 1
    %747 = vsyncpa %s746, 1
    %748 = vsyncpa [#allocation6], 1
    %s749 = scalar_lea.sflag [#allocation6], 1
    %750 = vsyncpa %s749, 1
    %751 = vsyncpa [#allocation4], 1
    %s752 = scalar_lea.sflag [#allocation4], 1
    %753 = vsyncpa %s752, 1

</llo_original>
